<compile_context>
chip_gen: v5e
topology: v5e:2x2
jax: 0.10.0
libtpu: 0.0.40
codegen_flags: <defaults>
</compile_context>

<pallas_src>
import functools

import numpy as np
import jax
import jax.numpy as jnp
from jax import lax
from jax.experimental import pallas as pl
from jax.experimental.pallas import tpu as pltpu

EPS = 1e-8
_BIG = 3.0e38          # finite sentinels for masked min/max (avoid inf)
LANE = 128
TILE_N = 8             # batch rows per grid step (sublane-aligned)


def _round_up(x: int, m: int) -> int:
    return ((x + m - 1) // m) * m


def _build_radial_mask(rows: int, cols: int):
    """Radius -> frequency-bin assignment masks (SpectralLoss.__init__),
    pre-padded to lane-dense shapes."""
    shift_rows = rows // 2
    cols_onesided = cols // 2 + 1
    idx = np.indices((rows, cols_onesided)) - np.array([[[shift_rows]], [[0]]])
    r = np.sqrt(idx[0] ** 2 + idx[1] ** 2).astype(int)
    r = np.fft.ifftshift(r, axes=0)            # shift center back to (0, 0)
    vector_length = int(r.max()) + 1
    mask = np.zeros((vector_length, rows, cols_onesided), dtype=np.float32)
    for i in range(vector_length):
        mask[i] = (r == i).astype(np.float32)
    # guard against empty radius bins (would give inf inverse counts)
    counts = np.clip(mask.sum(axis=(1, 2)), 1.0, None)

    P = rows * cols_onesided
    L = vector_length
    P_pad = _round_up(P, LANE)
    L_pad = _round_up(L, LANE)

    mask_pad = np.zeros((P_pad, L_pad), dtype=np.float32)
    mask_pad[:P, :L] = mask.reshape(L, P).T          # (P, L) block, zero-padded
    inv_pad = np.zeros((1, L_pad), dtype=np.float32)
    inv_pad[0, :L] = 1.0 / counts
    return jnp.asarray(mask_pad), jnp.asarray(inv_pad), L, P


def _spectral_disc_kernel(reim_ref, mask_ref, invn_ref, w_ref, b_ref, out_ref,
                          *, valid_len: int):
    # reim : (2, TILE_N, P_pad)  stacked real/imag of rfft2 (zero-padded)
    # mask : (P_pad, L_pad)      radial one-hot masks (zero in padded rows/cols)
    # invn : (1, L_pad)          1 / (#bins per radius), zero in padded lanes
    # w    : (1, L_pad)          Linear weight row, zero in padded lanes
    # b    : (1,)                Linear bias, in SMEM
    re = reim_ref[0]                                        # (TILE_N, P_pad)
    im = reim_ref[1]
    power = re * re + im * im + EPS
    logp = 20.0 * jnp.log(power)                            # (TILE_N, P_pad)

    # radial sum via MXU matmul, then per-radius mean (padded lanes -> 0)
    prof = jnp.dot(logp, mask_ref[...], preferred_element_type=jnp.float32)
    prof = prof * invn_ref[...]                             # (TILE_N, L_pad)

    # per-sample min/max normalization over the VALID lanes only
    lane = lax.broadcasted_iota(jnp.int32, prof.shape, 1)
    valid = lane < valid_len
    pmin = jnp.min(jnp.where(valid, prof, _BIG), axis=1, keepdims=True)
    pmax = jnp.max(jnp.where(valid, prof, -_BIG), axis=1, keepdims=True)
    prof = (prof - pmin) * pl.reciprocal(pmax - pmin + EPS, approx=True)

    # final Linear(L, 1) as a VPU multiply + lane reduce (padded lanes: w == 0)
    out_ref[...] = jnp.sum(prof * w_ref[...], axis=1, keepdims=True) + b_ref[0]


def spectral_discriminator(x, w, b, mask_pad, inv_pad, vector_length):
    """x: (N, C, H, W) float32 NCHW; w: (1, L); b: (1,). Returns (N, 1)."""
    N, C, H, W = x.shape
    P = H * (W // 2 + 1)
    P_pad, L_pad = mask_pad.shape
    L = vector_length

    gray = jnp.mean(x, axis=1)                               # (N, H, W)
    fft = jnp.fft.rfft2(gray)                                # (N, H, W//2+1)
    reim = jnp.stack([jnp.real(fft), jnp.imag(fft)], axis=0)
    reim = reim.reshape(2, N, P).astype(jnp.float32)

    N_pad = _round_up(N, TILE_N)
    reim = jnp.pad(reim, ((0, 0), (0, N_pad - N), (0, P_pad - P)))

    w_pad = jnp.zeros((1, L_pad), jnp.float32).at[0, :L].set(w.reshape(L))
    b_s = jnp.asarray(b, jnp.float32).reshape(1)

    kernel = functools.partial(_spectral_disc_kernel, valid_len=L)

    out = pl.pallas_call(
        kernel,
        out_shape=jax.ShapeDtypeStruct((N_pad, 1), jnp.float32),
        grid=(N_pad // TILE_N,),
        in_specs=[
            pl.BlockSpec((2, TILE_N, P_pad), lambda i: (0, i, 0)),   # re/im
            pl.BlockSpec((P_pad, L_pad), lambda i: (0, 0)),          # mask
            pl.BlockSpec((1, L_pad), lambda i: (0, 0)),              # 1/counts
            pl.BlockSpec((1, L_pad), lambda i: (0, 0)),              # weight
            pl.BlockSpec(memory_space=pltpu.MemorySpace.SMEM),       # bias
        ],
        out_specs=pl.BlockSpec((TILE_N, 1), lambda i: (i, 0)),
        compiler_params=pltpu.CompilerParams(
            dimension_semantics=("parallel",)),
    )(reim, mask_pad, inv_pad, w_pad, b_s)
    return out[:N]


def _reference(x, w, b, mask_pad, inv_pad, L, P):
    """Pure-JAX reference of the same forward (unpadded math)."""
    N = x.shape[0]
    gray = jnp.mean(x, axis=1)
    fft = jnp.fft.rfft2(gray)
    power = jnp.real(fft) ** 2 + jnp.imag(fft) ** 2 + EPS
    logp = (20.0 * jnp.log(power)).reshape(N, -1)
    mask = mask_pad[:P, :L]
    inv = inv_pad[:, :L]
    prof = logp @ mask * inv
    prof = prof - prof.min(axis=1, keepdims=True)
    prof = prof / (prof.max(axis=1, keepdims=True) + EPS)
    return prof @ w.reshape(L, 1) + b.reshape(1, 1)


if __name__ == "__main__":
    img_size = 16           # SpectralDiscriminator(img_size=16, spectral='linear')
    batch, channels = 2, 3  # x: NCHW

    mask_pad, inv_pad, vector_length, P = _build_radial_mask(img_size, img_size)

    key = jax.random.PRNGKey(0)
    kx, kw, kb = jax.random.split(key, 3)
    x = jax.random.normal(kx, (batch, channels, img_size, img_size),
                          dtype=jnp.float32)

    # nn.Linear(vector_length, 1) default init: U(-1/sqrt(in), 1/sqrt(in))
    bound = 1.0 / np.sqrt(vector_length)
    w = jax.random.uniform(kw, (1, vector_length), jnp.float32, -bound, bound)
    b = jax.random.uniform(kb, (1,), jnp.float32, -bound, bound)

    y = spectral_discriminator(x, w, b, mask_pad, inv_pad, vector_length)
    y = jax.block_until_ready(y)

    y_ref = jax.block_until_ready(_reference(x, w, b, mask_pad, inv_pad,
                                             vector_length, P))
    assert y.shape == (batch, 1)
    assert np.allclose(np.asarray(y), np.asarray(y_ref), rtol=1e-2, atol=1e-2)

    print("KERNEL_OK")
</pallas_src>

<mosaic_0001>
module attributes {stable_mosaic.version = 11 : i64} {
  func.func @_spectral_disc_kernel(%arg0: i32, %arg1: memref<2x8x256xf32, #tpu.memory_space<vmem>>, %arg2: memref<256x128xf32, #tpu.memory_space<vmem>>, %arg3: memref<1x128xf32, #tpu.memory_space<vmem>>, %arg4: memref<1x128xf32, #tpu.memory_space<vmem>>, %arg5: memref<1xf32, #tpu.memory_space<smem>>, %arg6: memref<8x1xf32, #tpu.memory_space<vmem>>) attributes {dimension_semantics = [#tpu.dimension_semantics<parallel>], iteration_bounds = array<i64: 1>, scalar_prefetch = 0 : i64, scratch_operands = 0 : i64, tpu.core_type = #tpu.core_type<tc>, window_params = [{transform_indices = @transform_0, window_bounds = array<i64: 2, 8, 256>}, {pipeline_mode = #tpu.pipeline_mode<synchronous>, transform_indices = @transform_1, window_bounds = array<i64: 256, 128>}, {pipeline_mode = #tpu.pipeline_mode<synchronous>, transform_indices = @transform_2, window_bounds = array<i64: 1, 128>}, {pipeline_mode = #tpu.pipeline_mode<synchronous>, transform_indices = @transform_3, window_bounds = array<i64: 1, 128>}, {transform_indices = @transform_4, window_bounds = array<i64: 1>}, {transform_indices = @transform_5, window_bounds = array<i64: 8, 1>}]} {
    %c0 = arith.constant 0 : index
    %c0_0 = arith.constant 0 : index
    %c0_1 = arith.constant 0 : index
    %0 = vector.load %arg1[%c0, %c0_0, %c0_1] : memref<2x8x256xf32, #tpu.memory_space<vmem>>, vector<1x8x256xf32>
    %1 = vector.shape_cast %0 : vector<1x8x256xf32> to vector<8x256xf32>
    %c1 = arith.constant 1 : index
    %c0_2 = arith.constant 0 : index
    %c0_3 = arith.constant 0 : index
    %2 = vector.load %arg1[%c1, %c0_2, %c0_3] : memref<2x8x256xf32, #tpu.memory_space<vmem>>, vector<1x8x256xf32>
    %3 = vector.shape_cast %2 : vector<1x8x256xf32> to vector<8x256xf32>
    %4 = arith.mulf %1, %1 : vector<8x256xf32>
    %5 = arith.mulf %3, %3 : vector<8x256xf32>
    %6 = arith.addf %4, %5 : vector<8x256xf32>
    %cst = arith.constant 9.99999993E-9 : f32
    %7 = vector.broadcast %cst : f32 to vector<8x256xf32>
    %8 = arith.addf %6, %7 : vector<8x256xf32>
    %9 = math.log %8 : vector<8x256xf32>
    %cst_4 = arith.constant 2.000000e+01 : f32
    %10 = vector.broadcast %cst_4 : f32 to vector<8x256xf32>
    %11 = arith.mulf %10, %9 : vector<8x256xf32>
    %c0_5 = arith.constant 0 : index
    %c0_6 = arith.constant 0 : index
    %12 = vector.load %arg2[%c0_5, %c0_6] : memref<256x128xf32, #tpu.memory_space<vmem>>, vector<256x128xf32>
    %cst_7 = arith.constant dense<0.000000e+00> : vector<8x128xf32>
    %13 = tpu.matmul %11, %12, %cst_7 {dimension_numbers = #tpu.dot_dimension_numbers<[1], [0], [0], [1], [0, 0, 1, 1], [], []>} : vector<8x256xf32>, vector<256x128xf32>, vector<8x128xf32> -> vector<8x128xf32>
    %c0_8 = arith.constant 0 : index
    %c0_9 = arith.constant 0 : index
    %14 = vector.load %arg3[%c0_8, %c0_9] : memref<1x128xf32, #tpu.memory_space<vmem>>, vector<1x128xf32>
    %15 = vector.broadcast %14 : vector<1x128xf32> to vector<8x128xf32>
    %16 = arith.mulf %13, %15 : vector<8x128xf32>
    %17 = tpu.iota {dimensions = array<i32: 1>} : vector<8x128xi32>
    %c12_i32 = arith.constant 12 : i32
    %18 = vector.broadcast %c12_i32 : i32 to vector<8x128xi32>
    %19 = arith.cmpi slt, %17, %18 : vector<8x128xi32>
    %cst_10 = arith.constant 3.000000e+38 : f32
    %20 = vector.broadcast %cst_10 : f32 to vector<8x128xf32>
    %21 = arith.select %19, %16, %20 : vector<8x128xi1>, vector<8x128xf32>
    %cst_11 = arith.constant dense<0x7F800000> : vector<8xf32>
    %22 = vector.multi_reduction <minimumf>, %21, %cst_11 [1] : vector<8x128xf32> to vector<8xf32>
    %23 = vector.shape_cast %22 : vector<8xf32> to vector<8x1xf32>
    %cst_12 = arith.constant -3.000000e+38 : f32
    %24 = vector.broadcast %cst_12 : f32 to vector<8x128xf32>
    %25 = arith.select %19, %16, %24 : vector<8x128xi1>, vector<8x128xf32>
    %cst_13 = arith.constant dense<0xFF800000> : vector<8xf32>
    %26 = vector.multi_reduction <maximumf>, %25, %cst_13 [1] : vector<8x128xf32> to vector<8xf32>
    %27 = vector.shape_cast %26 : vector<8xf32> to vector<8x1xf32>
    %28 = vector.broadcast %23 : vector<8x1xf32> to vector<8x128xf32>
    %29 = arith.subf %16, %28 : vector<8x128xf32>
    %30 = arith.subf %27, %23 : vector<8x1xf32>
    %cst_14 = arith.constant 9.99999993E-9 : f32
    %31 = vector.broadcast %cst_14 : f32 to vector<8x1xf32>
    %32 = arith.addf %30, %31 : vector<8x1xf32>
    %33 = tpu.reciprocal %32 {approx = true} : vector<8x1xf32> -> vector<8x1xf32>
    %34 = vector.broadcast %33 : vector<8x1xf32> to vector<8x128xf32>
    %35 = arith.mulf %29, %34 : vector<8x128xf32>
    %c0_15 = arith.constant 0 : index
    %c0_16 = arith.constant 0 : index
    %36 = vector.load %arg4[%c0_15, %c0_16] : memref<1x128xf32, #tpu.memory_space<vmem>>, vector<1x128xf32>
    %37 = vector.broadcast %36 : vector<1x128xf32> to vector<8x128xf32>
    %38 = arith.mulf %35, %37 : vector<8x128xf32>
    %cst_17 = arith.constant dense<0.000000e+00> : vector<8xf32>
    %39 = vector.multi_reduction <add>, %38, %cst_17 [1] : vector<8x128xf32> to vector<8xf32>
    %40 = vector.shape_cast %39 : vector<8xf32> to vector<8x1xf32>
    %c0_18 = arith.constant 0 : index
    %41 = memref.load %arg5[%c0_18] : memref<1xf32, #tpu.memory_space<smem>>
    %42 = vector.broadcast %41 : f32 to vector<8x1xf32>
    %43 = arith.addf %40, %42 : vector<8x1xf32>
    %c0_19 = arith.constant 0 : index
    %c0_20 = arith.constant 0 : index
    %44 = vector.load %arg6[%c0_19, %c0_20] : memref<8x1xf32, #tpu.memory_space<vmem>>, vector<8x1xf32>
    tpu.vector_store %arg6[%c0_19, %c0_20], %43 {strides = array<i32>} : memref<8x1xf32, #tpu.memory_space<vmem>>, vector<8x1xf32>,
    return
  }
  func.func @transform_0(%arg0: i32) -> (i32, i32, i32) {
    %c0_i32 = arith.constant 0 : i32
    %c0_i32_0 = arith.constant 0 : i32
    %c0_i32_1 = arith.constant 0 : i32
    return %c0_i32, %arg0, %c0_i32_0 : i32, i32, i32
  }
  func.func @transform_1(%arg0: i32) -> (i32, i32) {
    %c0_i32 = arith.constant 0 : i32
    %c0_i32_0 = arith.constant 0 : i32
    %c0_i32_1 = arith.constant 0 : i32
    return %c0_i32, %c0_i32_0 : i32, i32
  }
  func.func @transform_2(%arg0: i32) -> (i32, i32) {
    %c0_i32 = arith.constant 0 : i32
    %c0_i32_0 = arith.constant 0 : i32
    %c0_i32_1 = arith.constant 0 : i32
    return %c0_i32, %c0_i32_0 : i32, i32
  }
  func.func @transform_3(%arg0: i32) -> (i32, i32) {
    %c0_i32 = arith.constant 0 : i32
    %c0_i32_0 = arith.constant 0 : i32
    %c0_i32_1 = arith.constant 0 : i32
    return %c0_i32, %c0_i32_0 : i32, i32
  }
  func.func @transform_4(%arg0: i32) -> i32 {
    %c0_i32 = arith.constant 0 : i32
    %c0_i32_0 = arith.constant 0 : i32
    return %c0_i32 : i32
  }
  func.func @transform_5(%arg0: i32) -> (i32, i32) {
    %c0_i32 = arith.constant 0 : i32
    %c0_i32_0 = arith.constant 0 : i32
    return %arg0, %c0_i32 : i32, i32
  }
}

</mosaic_0001>

<llo_original>
// kernel: tpu_custom_call.1
$region0: #{tpu_custom_call.1}
  #allocation0 [shape = 'u32[]', space=smem, size = 0x4, offset = 0x4, fixed_abs, tag = 'smem constant byte address 0x4 - core index']
  #allocation1 [shape = 'u32[72,128]{1,0:T(1,128)}', space=vmem, size = 0x9000, scoped, tag = 'internal scratch']
  #allocation2 [shape = 'f32[1]{0:T(128)S(6)}', space=smem, size = 0x200, scoped, tag = 'scoped memory for tpu_custom_call.1']
  %s0 = inlined_call_operand.hbm [shape: f32[2,8,256], index: 0, kind: input, shape index: {}]
  %s1 = inlined_call_operand.hbm [shape: f32[256,128], index: 1, kind: input, shape index: {}]
  %s2 = inlined_call_operand.vmem [shape: f32[1,128], index: 2, kind: input, shape index: {}]
  %s3 = inlined_call_operand.vmem [shape: f32[1,128], index: 3, kind: input, shape index: {}]
  %s4 = inlined_call_operand.<no memory space> [shape: f32[1], index: 4, kind: input, shape index: {}]
  %s5 = inlined_call_operand.vmem [shape: f32[8,1], index: 5, kind: output, shape index: {}]
  %s6 = sld [smem:[#allocation0]]
  $region38: #{tpu_custom_call.1} parent=0
    _
  %s8 = ssub.s32 1, %s6
  %s9 = scalar_select 0, %s8, %s6
  %10 = sst [smem:[#allocation2]] %s4
  $region1: #{tpu_custom_call.1} parent=0
    #allocation3 [shape = 'u8[16384]{0}', space=vmem, size = 0x4000, scoped, tag = 'input window, operand 0, single buffered']
    #allocation4 [shape = 's32[1]{0}', space=sflag, size = 0x4, scoped, tag = 'scoped memory for tpu_custom_call.1']
    #allocation5 [shape = 'u8[131072]{0}', space=vmem, size = 0x20000, scoped, tag = 'input window, operand 1, single buffered']
    #allocation6 [shape = 's32[1]{0}', space=sflag, size = 0x4, scoped, tag = 'scoped memory for tpu_custom_call.1']
    %11 = vsyncpa [#allocation4], 0
    %12 = vsyncpa [#allocation6], 0
    // Predicated region
    $region2: #{tpu_custom_call.1} parent=1 // pred_check
      _
    $region3: #{tpu_custom_call.1} parent=1 // pred_check_branch
      %14 = sbr.rel (0) target = $region5
    $region4: #{tpu_custom_call.1} parent=1 // pred_region
      %16 = vsyncadd [#allocation4], 0
      %s17 = sshll.u32 %s0, 4
      %s18 = int_to_ptr.hbm [resolvable:$true] %s17
      %s19 = sshll.u32 [#allocation3], 4
      %s20 = int_to_ptr.vmem [resolvable:$true] %s19
      %25 = dma.hbm_to_vmem [thread:$0]  %s18, 512, %s20, [#allocation4], 256, 256, 16
    $region5: #{tpu_custom_call.1} parent=1 // pred_fallthru
      _
    // Predicated region
    $region6: #{tpu_custom_call.1} parent=1 // pred_check
      _
    $region7: #{tpu_custom_call.1} parent=1 // pred_check_branch
      %27 = sbr.rel (0) target = $region9
    $region8: #{tpu_custom_call.1} parent=1 // pred_region
      %29 = vsyncadd [#allocation6], 0
      %s30 = sshll.u32 %s1, 4
      %s31 = int_to_ptr.hbm [resolvable:$true] %s30
      %s32 = sshll.u32 [#allocation5], 4
      %s33 = int_to_ptr.vmem [resolvable:$true] %s32
      %38 = dma.hbm_to_vmem [thread:$0]  %s31, 4096, %s33, [#allocation6], 128, 128, 8
    $region9: #{tpu_custom_call.1} parent=1 // pred_fallthru
      _
    // Predicated region
    $region10: #{tpu_custom_call.1} parent=1 // pred_check
      _
    $region11: #{tpu_custom_call.1} parent=1 // pred_check_branch
      %40 = sbr.rel (0) target = $region13
    $region12: #{tpu_custom_call.1} parent=1 // pred_region
      _
    $region13: #{tpu_custom_call.1} parent=1 // pred_fallthru
      _
    // Predicated region
    $region14: #{tpu_custom_call.1} parent=1 // pred_check
      _
    $region15: #{tpu_custom_call.1} parent=1 // pred_check_branch
      %42 = sbr.rel (0) target = $region17
    $region16: #{tpu_custom_call.1} parent=1 // pred_region
      _
    $region17: #{tpu_custom_call.1} parent=1 // pred_fallthru
      _
    // Predicated region
    $region18: #{tpu_custom_call.1} parent=1 // pred_check
      _
    $region19: #{tpu_custom_call.1} parent=1 // pred_check_branch
      %44 = sbr.rel (0) target = $region21
    $region20: #{tpu_custom_call.1} parent=1 // pred_region
      _
    $region21: #{tpu_custom_call.1} parent=1 // pred_fallthru
      _
    // Predicated region
    $region22: #{tpu_custom_call.1} parent=1 // pred_check
      _
    $region23: #{tpu_custom_call.1} parent=1 // pred_check_branch
      %46 = sbr.rel (0) target = $region25
    $region24: #{tpu_custom_call.1} parent=1 // pred_region
      %48 = dma.done [#allocation4], 512
    $region25: #{tpu_custom_call.1} parent=1 // pred_fallthru
      _
    // Predicated region
    $region26: #{tpu_custom_call.1} parent=1 // pred_check
      _
    $region27: #{tpu_custom_call.1} parent=1 // pred_check_branch
      %50 = sbr.rel (0) target = $region29
    $region28: #{tpu_custom_call.1} parent=1 // pred_region
      %52 = dma.done [#allocation6], 4096
    $region29: #{tpu_custom_call.1} parent=1 // pred_fallthru
      _
    %v53 = vld [vmem:[#allocation3] sm:$0xff]
    %v54 = vld [vmem:[#allocation3 + $0x8] sm:$0xff]
    %s55 = scalar_lea.vmem [#allocation3], 16
    %v56 = vld [vmem:[%s55] sm:$0xff]
    %v57 = vld [vmem:[%s55 + $0x8] sm:$0xff]
    %v58 = vmul.f32 %v53, %v53
    %v59 = vmul.f32 %v54, %v54
    %v60 = vmul.f32 %v56, %v56
    %v61 = vmul.f32 %v57, %v57
    %v62 = vadd.f32 %v58, %v60
    %v63 = vadd.f32 %v59, %v61
    %v64 = vadd.f32 %v62, 1e-08
    %v65 = vadd.f32 %v63, 1e-08
    %v66 = vlog2.pop %v64
    %v67 = vmul.f32 %v66, 0.6931472
    %v68 = vlog2.pop %v65
    %v69 = vmul.f32 %v68, 0.6931472
    %v70 = vmul.f32 %v67, 20.0
    %v71 = vmul.f32 %v69, 20.0
    %v72 = vld [vmem:[#allocation5] sm:$0xff]
    %v73 = vld [vmem:[#allocation5 + $0x8] sm:$0xff]
    %v74 = vld [vmem:[#allocation5 + $0x10] sm:$0xff]
    %v75 = vld [vmem:[#allocation5 + $0x18] sm:$0xff]
    %v76 = vld [vmem:[#allocation5 + $0x20] sm:$0xff]
    %v77 = vld [vmem:[#allocation5 + $0x28] sm:$0xff]
    %v78 = vld [vmem:[#allocation5 + $0x30] sm:$0xff]
    %v79 = vld [vmem:[#allocation5 + $0x38] sm:$0xff]
    %v80 = vld [vmem:[#allocation5 + $0x40] sm:$0xff]
    %v81 = vld [vmem:[#allocation5 + $0x48] sm:$0xff]
    %v82 = vld [vmem:[#allocation5 + $0x50] sm:$0xff]
    %v83 = vld [vmem:[#allocation5 + $0x58] sm:$0xff]
    %v84 = vld [vmem:[#allocation5 + $0x60] sm:$0xff]
    %v85 = vld [vmem:[#allocation5 + $0x68] sm:$0xff]
    %v86 = vld [vmem:[#allocation5 + $0x70] sm:$0xff]
    %v87 = vld [vmem:[#allocation5 + $0x78] sm:$0xff]
    %v88 = vld [vmem:[#allocation5 + $0x80] sm:$0xff]
    %v89 = vld [vmem:[#allocation5 + $0x88] sm:$0xff]
    %v90 = vld [vmem:[#allocation5 + $0x90] sm:$0xff]
    %v91 = vld [vmem:[#allocation5 + $0x98] sm:$0xff]
    %v92 = vld [vmem:[#allocation5 + $0xa0] sm:$0xff]
    %v93 = vld [vmem:[#allocation5 + $0xa8] sm:$0xff]
    %v94 = vld [vmem:[#allocation5 + $0xb0] sm:$0xff]
    %v95 = vld [vmem:[#allocation5 + $0xb8] sm:$0xff]
    %v96 = vld [vmem:[#allocation5 + $0xc0] sm:$0xff]
    %v97 = vld [vmem:[#allocation5 + $0xc8] sm:$0xff]
    %v98 = vld [vmem:[#allocation5 + $0xd0] sm:$0xff]
    %v99 = vld [vmem:[#allocation5 + $0xd8] sm:$0xff]
    %v100 = vld [vmem:[#allocation5 + $0xe0] sm:$0xff]
    %v101 = vld [vmem:[#allocation5 + $0xe8] sm:$0xff]
    %v102 = vld [vmem:[#allocation5 + $0xf0] sm:$0xff]
    %v103 = vld [vmem:[#allocation5 + $0xf8] sm:$0xff]
    %104 = vmatpush.msra.mxu0 %v87
    %105 = vmatpush.msra.mxu0 %v86
    %106 = vmatpush.msra.mxu0 %v85
    %107 = vmatpush.msra.mxu0 %v84
    %108 = vmatpush.msra.mxu0 %v83
    %109 = vmatpush.msra.mxu0 %v82
    %110 = vmatpush.msra.mxu0 %v81
    %111 = vmatpush.msra.mxu0 %v80
    %112 = vmatpush.msra.mxu0 %v79
    %113 = vmatpush.msra.mxu0 %v78
    %114 = vmatpush.msra.mxu0 %v77
    %115 = vmatpush.msra.mxu0 %v76
    %116 = vmatpush.msra.mxu0 %v75
    %117 = vmatpush.msra.mxu0 %v74
    %118 = vmatpush.msra.mxu0 %v73
    %119 = vmatpush.msra.mxu0 %v72
    %120 = vmatmul.f32.gmra.mxu0 %v70
    %v121 = vpop.f32.mrf.mxu0
    %v122 = vadd.f32 0.0, %v121
    %123 = vdwg.mxu0
    %124 = vmatpush.msra.mxu0 %v103
    %125 = vmatpush.msra.mxu0 %v102
    %126 = vmatpush.msra.mxu0 %v101
    %127 = vmatpush.msra.mxu0 %v100
    %128 = vmatpush.msra.mxu0 %v99
    %129 = vmatpush.msra.mxu0 %v98
    %130 = vmatpush.msra.mxu0 %v97
    %131 = vmatpush.msra.mxu0 %v96
    %132 = vmatpush.msra.mxu0 %v95
    %133 = vmatpush.msra.mxu0 %v94
    %134 = vmatpush.msra.mxu0 %v93
    %135 = vmatpush.msra.mxu0 %v92
    %136 = vmatpush.msra.mxu0 %v91
    %137 = vmatpush.msra.mxu0 %v90
    %138 = vmatpush.msra.mxu0 %v89
    %139 = vmatpush.msra.mxu0 %v88
    %140 = vmatmul.f32.gmra.mxu0 %v71
    %v141 = vpop.f32.mrf.mxu0
    %v142 = vadd.f32 %v122, %v141
    %143 = vdwg.mxu0
    %v144 = vld [vmem:[%s2] sm:$0x1]
    %v146 = vperm.slane %v144, 0
    %v148 = vmul.f32 %v142, %v146
    %v149 = vlaneseq
    %v150 = vand.u32 %v149, 127
    %vm151 = vcmp.lt.s32.totalorder %v150, 12
    %v152 = vsel %vm151, %v148, 3e+38
    %153 = vmin.xlane.f32.xlu0 %v152
    %v154 = vpop.xlane.xlu0 %153
    %v155 = vsel %vm151, %v148, -3e+38
    %156 = vmax.xlane.f32.xlu0 %v155
    %v157 = vpop.xlane.xlu0 %156
    %v158 = vsub.f32 %v148, %v154
    %v159 = vsub.f32 %v157, %v154
    %v160 = vadd.f32 %v159, 1e-08
    %v161 = vrcp.pop %v160
    %v162 = vmul.f32 %v158, %v161
    %v163 = vld [vmem:[%s3] sm:$0x1]
    %v165 = vperm.slane %v163, 0
    %v167 = vmul.f32 %v162, %v165
    %168 = vadd.xlane.f32.xlu0 %v167
    %v169 = vpop.xlane.xlu0 %168
    %s170 = sld [smem:[#allocation2]]
    %v171 = vstv %s170
    %v172 = vadd.f32 %v169, %v171
    %vm173 = vcmask 7168
    %174 = vst.msk [vmem:[%s5] sm:$0xff] %vm173, %v172
    // Predicated region
    $region30: #{tpu_custom_call.1} parent=1 // pred_check
      _
    $region31: #{tpu_custom_call.1} parent=1 // pred_check_branch
      %176 = sbr.rel (0) target = $region33
    $region32: #{tpu_custom_call.1} parent=1 // pred_region
      _
    $region33: #{tpu_custom_call.1} parent=1 // pred_fallthru
      _
    // Predicated region
    $region34: #{tpu_custom_call.1} parent=1 // pred_check
      _
    $region35: #{tpu_custom_call.1} parent=1 // pred_check_branch
      %178 = sbr.rel (0) target = $region37
    $region36: #{tpu_custom_call.1} parent=1 // pred_region
      _
    $region37: #{tpu_custom_call.1} parent=1 // pred_fallthru
      _
    %179 = vsyncpa [#allocation4], 1
    %180 = vsyncpa [#allocation6], 1

</llo_original>
